<compile_context>
chip_gen: v5e
topology: v5e:2x2
jax: 0.10.0
libtpu: 0.0.40
codegen_flags: <defaults>
</compile_context>

<pallas_src>
import functools

import jax
import jax.numpy as jnp
from jax.experimental import pallas as pl
from jax.experimental.pallas import tpu as pltpu

_NEG = -1.0e30   # python float "minus infinity" sentinel (never captured as a jnp constant)


def _topk_desc(x, k, axis):
    """Top-k values of `x` along `axis`, descending, duplicates preserved via
    first-occurrence masking; returned with that axis of size k."""
    if k == 1:
        return jnp.max(x, axis=axis, keepdims=True)
    n = x.shape[axis]
    idx = jax.lax.broadcasted_iota(jnp.float32, x.shape, axis)
    outs = []
    work = x
    for t in range(k):
        m = jnp.max(work, axis=axis, keepdims=True)
        outs.append(m)
        if t + 1 < k:
            first = jnp.min(jnp.where(work == m, idx, float(n)),
                            axis=axis, keepdims=True)
            work = jnp.where(idx == first, _NEG, work)
    return jnp.concatenate(outs, axis=axis)


def _hard_negative_kernel(imgs_ref, caps_ref, flip_ref, *rest, nmax, margin, use_pad):
    if use_pad:
        (rbias_ref, cbias_ref, out_ref,
         row_top_ref, col_top_ref, dcol_ref, drow_ref) = rest
    else:
        (out_ref, row_top_ref, col_top_ref, dcol_ref, drow_ref) = rest

    i = pl.program_id(0)            # row-tile index    (outer)
    j = pl.program_id(1)            # column-tile index (inner, fastest)
    ni = pl.num_programs(0)
    nj = pl.num_programs(1)

    @pl.when((i == 0) & (j == 0))
    def _init_out():
        out_ref[...] = jnp.zeros(out_ref.shape, out_ref.dtype)

    # MXU matmul in the native input dtype, contracting the last dims (imgs @ caps^T),
    # f32 accumulation.
    s = jax.lax.dot_general(
        imgs_ref[...], caps_ref[...],
        dimension_numbers=(((1,), (1,)), ((), ())),
        preferred_element_type=jnp.float32)                        # (T, T) f32

    # Diagonal sign flip with one multiply: slab 0 = 1 - 2I (i == j tiles), slab 1 = ones.
    flip = flip_ref[jnp.where(i == j, 0, 1)]                       # (T, T) f32
    sf = s * flip
    if use_pad:
        mod = sf + rbias_ref[...] + cbias_ref[...]                 # mask padded rows/cols
    else:
        mod = sf

    # Capture diag(scores) from the diagonal tile (used by both hinge terms).
    @pl.when(i == j)
    def _capture_diag():
        sd = (s - sf) * 0.5                                        # diag of s, 0 elsewhere
        dcol_ref[...] = jnp.sum(sd, axis=1, keepdims=True)         # (T, 1)
        drow_ref[j] = jnp.sum(sd, axis=0, keepdims=True)           # (1, T)

    # ---------- img side: running top-nmax along each row (accumulated over j) ----------
    @pl.when(j == 0)
    def _init_row_top():
        row_top_ref[...] = jnp.full(row_top_ref.shape, _NEG, row_top_ref.dtype)

    local_r = _topk_desc(mod, nmax, axis=1)                        # (T, nmax)
    merged_r = _topk_desc(jnp.concatenate([row_top_ref[...], local_r], axis=1),
                          nmax, axis=1)                            # (T, nmax)
    row_top_ref[...] = merged_r                                    # one batched store

    @pl.when(j == nj - 1)           # row block i's top-k is now complete
    def _finalize_rows():
        h = jnp.maximum(merged_r + (margin - dcol_ref[...]), 0.0)  # (T, nmax)
        tot = jnp.sum(jnp.sum(h, axis=1, keepdims=True), axis=0, keepdims=True)
        out_ref[...] += tot

    # ---------- cap side: running top-nmax along each column (accumulated over i) -------
    @pl.when(i == 0)
    def _init_col_top():
        col_top_ref[j] = jnp.full(col_top_ref.shape[1:], _NEG, col_top_ref.dtype)

    local_c = _topk_desc(mod, nmax, axis=0)                        # (nmax, T)
    merged_c = _topk_desc(jnp.concatenate([col_top_ref[j], local_c], axis=0),
                          nmax, axis=0)                            # (nmax, T)
    col_top_ref[j] = merged_c                                      # one batched store

    @pl.when(i == ni - 1)           # column block j's top-k is now complete
    def _finalize_cols():
        h = jnp.maximum(merged_c + (margin - drow_ref[j]), 0.0)    # (nmax, T)
        tot = jnp.sum(jnp.sum(h, axis=1, keepdims=True), axis=0, keepdims=True)
        out_ref[...] += tot


def _round_up(x, m):
    return ((x + m - 1) // m) * m


def hard_negative_contrastive_loss(imgs, caps, nmax=1, margin=0.2, tile=None):
    """imgs: (N, D), caps: (N, D) -> scalar loss (float32), matching the PyTorch module.

    NOTE: for very small batches (N <~ 512) the fixed pallas_call overhead dominates and a
    plain-XLA implementation would be as fast; the Pallas path is always taken here so the
    kernel is exercised.
    """
    N, D = imgs.shape
    assert caps.shape == (N, D)
    assert nmax >= 1

    if tile is None:
        # T=512 quarters the grid-step count vs 256; VMEM stays a few MiB, safe on
        # v5e/v6e (128 MiB) and v7x (64 MiB).
        tile = min(512, _round_up(N, 128))
    assert tile % 128 == 0, "tile must be a multiple of the 128-lane width"
    T = tile
    n_pad = _round_up(N, T)
    pad = n_pad - N
    use_pad = pad > 0
    if use_pad:
        imgs_p = jnp.pad(imgs, ((0, pad), (0, 0)))
        caps_p = jnp.pad(caps, ((0, pad), (0, 0)))
    else:
        imgs_p, caps_p = imgs, caps
    nt = n_pad // T

    # Tiny resident constant: slab 0 = 1 - 2I (diagonal tiles), slab 1 = all ones.
    # Constant index_map -> DMA'd once, never re-streamed.
    flip_const = jnp.stack(
        [1.0 - 2.0 * jnp.eye(T, dtype=jnp.float32),
         jnp.ones((T, T), dtype=jnp.float32)], axis=0)             # (2, T, T)

    inputs = [imgs_p, caps_p, flip_const]
    in_specs = [
        pl.BlockSpec((T, D), lambda i, j: (i, 0)),                 # imgs row block
        pl.BlockSpec((T, D), lambda i, j: (j, 0)),                 # caps row block (B^T via dot_general)
        pl.BlockSpec((2, T, T), lambda i, j: (0, 0, 0)),           # flip slabs (resident)
    ]
    if use_pad:
        bias = jnp.where(jnp.arange(n_pad) < N, 0.0, _NEG).astype(jnp.float32)
        inputs += [bias[:, None], bias[None, :]]
        in_specs += [
            pl.BlockSpec((T, 1), lambda i, j: (i, 0)),             # row padding bias
            pl.BlockSpec((1, T), lambda i, j: (0, j)),             # col padding bias
        ]

    # TODO(synk): v6e/v5e large-D memory-bound case could keep the whole caps array
    # resident in VMEM (BlockSpec((n_pad, D), lambda i, j: (0, 0))) to cut the re-stream.
    kernel = functools.partial(_hard_negative_kernel, nmax=nmax,
                               margin=float(margin), use_pad=use_pad)
    out = pl.pallas_call(
        kernel,
        out_shape=jax.ShapeDtypeStruct((1, 1), jnp.float32),
        grid_spec=pltpu.PrefetchScalarGridSpec(
            num_scalar_prefetch=0,
            grid=(nt, nt),
            in_specs=in_specs,
            out_specs=pl.BlockSpec((1, 1), lambda i, j: (0, 0)),
            scratch_shapes=[
                pltpu.VMEM((T, nmax), jnp.float32),                # per-row running top-k
                pltpu.VMEM((nt, nmax, T), jnp.float32),            # per-column running top-k
                pltpu.VMEM((T, 1), jnp.float32),                   # diag for current row block
                pltpu.VMEM((nt, 1, T), jnp.float32),               # diag per column block
            ]),
        # Both axes must stay "arbitrary": row accumulators carry across j, column
        # accumulators carry across i.
        # TODO(synk): v7x megacore split -- give each TensorCore a disjoint half of the row
        # tiles with private column accumulators and merge in a small epilogue (~2x on v7x).
        compiler_params=pltpu.CompilerParams(
            dimension_semantics=("arbitrary", "arbitrary"),
            vmem_limit_bytes=64 * 1024 * 1024),
    )(*inputs)
    return out[0, 0]


def _reference_loss(imgs, caps, nmax=1, margin=0.2):
    # Pure-JAX transcription of the PyTorch forward, for verification.
    scores = imgs @ caps.T
    diag = jnp.diag(scores)
    scores = scores - 2.0 * jnp.diag(diag)
    sorted_cap = -jnp.sort(-scores, axis=0)   # descending along dim 0
    sorted_img = -jnp.sort(-scores, axis=1)   # descending along dim 1
    max_c = sorted_cap[:nmax, :]
    max_i = sorted_img[:, :nmax]
    neg_cap = jnp.sum(jnp.maximum(max_c + (margin - diag)[None, :], 0.0))
    neg_img = jnp.sum(jnp.maximum(max_i + (margin - diag)[:, None], 0.0))
    return neg_cap + neg_img


if __name__ == "__main__":
    key = jax.random.PRNGKey(0)
    k_img, k_cap, k_img2, k_cap2 = jax.random.split(key, 4)

    # Multi-tile + padding path: N=200 (padded to 256), tile=128 -> 2x2 grid.
    N, D = 200, 64
    imgs = jax.random.normal(k_img, (N, D), dtype=jnp.float32) * 0.1
    caps = jax.random.normal(k_cap, (N, D), dtype=jnp.float32) * 0.1
    for nmax in (1, 2):
        loss = hard_negative_contrastive_loss(imgs, caps, nmax=nmax, margin=0.2, tile=128)
        loss = jax.block_until_ready(loss)
        ref = _reference_loss(imgs, caps, nmax=nmax, margin=0.2)
        assert jnp.allclose(loss, ref, rtol=1e-3, atol=1e-2), (nmax, loss, ref)

    # Exact-multiple (no padding) path, tile=128 (2x2 grid) and default-tile path.
    N2 = 256
    imgs2 = jax.random.normal(k_img2, (N2, D), dtype=jnp.float32) * 0.1
    caps2 = jax.random.normal(k_cap2, (N2, D), dtype=jnp.float32) * 0.1
    loss2 = hard_negative_contrastive_loss(imgs2, caps2, nmax=1, margin=0.2, tile=128)
    loss2 = jax.block_until_ready(loss2)
    ref2 = _reference_loss(imgs2, caps2, nmax=1, margin=0.2)
    assert jnp.allclose(loss2, ref2, rtol=1e-3, atol=1e-2), (loss2, ref2)

    loss2d = hard_negative_contrastive_loss(imgs2, caps2, nmax=2, margin=0.2)  # default tile
    loss2d = jax.block_until_ready(loss2d)
    ref2d = _reference_loss(imgs2, caps2, nmax=2, margin=0.2)
    assert jnp.allclose(loss2d, ref2d, rtol=1e-3, atol=1e-2), (loss2d, ref2d)

    # bf16 inputs fed straight to the MXU (native-dtype path); loose check vs f32 reference.
    loss_bf = hard_negative_contrastive_loss(imgs.astype(jnp.bfloat16),
                                             caps.astype(jnp.bfloat16),
                                             nmax=1, margin=0.2, tile=128)
    loss_bf = jax.block_until_ready(loss_bf)
    ref_f32 = _reference_loss(imgs, caps, nmax=1, margin=0.2)
    assert jnp.allclose(loss_bf, ref_f32, rtol=5e-2, atol=1.0), (loss_bf, ref_f32)

    print("KERNEL_OK")
</pallas_src>

<mosaic_0001>
module attributes {stable_mosaic.version = 11 : i64} {
  func.func @_hard_negative_kernel(%arg0: i32, %arg1: i32, %arg2: memref<128x64xf32, #tpu.memory_space<vmem>>, %arg3: memref<128x64xf32, #tpu.memory_space<vmem>>, %arg4: memref<2x128x128xf32, #tpu.memory_space<vmem>>, %arg5: memref<128x1xf32, #tpu.memory_space<vmem>>, %arg6: memref<1x128xf32, #tpu.memory_space<vmem>>, %arg7: memref<1x1xf32, #tpu.memory_space<vmem>>, %arg8: memref<128x1xf32, #tpu.memory_space<vmem>>, %arg9: memref<2x1x128xf32, #tpu.memory_space<vmem>>, %arg10: memref<128x1xf32, #tpu.memory_space<vmem>>, %arg11: memref<2x1x128xf32, #tpu.memory_space<vmem>>) attributes {dimension_semantics = [#tpu.dimension_semantics<arbitrary>, #tpu.dimension_semantics<arbitrary>], iteration_bounds = array<i64: 2, 2>, scalar_prefetch = 0 : i64, scratch_operands = 4 : i64, tpu.core_type = #tpu.core_type<tc>, window_params = [{transform_indices = @transform_0, window_bounds = array<i64: 128, 64>}, {transform_indices = @transform_1, window_bounds = array<i64: 128, 64>}, {pipeline_mode = #tpu.pipeline_mode<synchronous>, transform_indices = @transform_2, window_bounds = array<i64: 2, 128, 128>}, {transform_indices = @transform_3, window_bounds = array<i64: 128, 1>}, {transform_indices = @transform_4, window_bounds = array<i64: 1, 128>}, {pipeline_mode = #tpu.pipeline_mode<synchronous>, transform_indices = @transform_5, window_bounds = array<i64: 1, 1>}]} {
    %c0_i32 = arith.constant 0 : i32
    %0 = arith.cmpi eq, %arg0, %c0_i32 : i32
    %c0_i32_0 = arith.constant 0 : i32
    %1 = arith.cmpi eq, %arg1, %c0_i32_0 : i32
    %2 = arith.andi %0, %1 : i1
    %3 = arith.extui %2 : i1 to i32
    %c0_i32_1 = arith.constant 0 : i32
    %4 = arith.cmpi ne, %3, %c0_i32_1 : i32
    scf.if %4 {
      %cst_33 = arith.constant 0.000000e+00 : f32
      %54 = vector.broadcast %cst_33 : f32 to vector<1x1xf32>
      %c0_34 = arith.constant 0 : index
      %c0_35 = arith.constant 0 : index
      %55 = vector.load %arg7[%c0_34, %c0_35] : memref<1x1xf32, #tpu.memory_space<vmem>>, vector<1x1xf32>
      tpu.vector_store %arg7[%c0_34, %c0_35], %54 {strides = array<i32>} : memref<1x1xf32, #tpu.memory_space<vmem>>, vector<1x1xf32>,
    } else {
    }
    %c0 = arith.constant 0 : index
    %c0_2 = arith.constant 0 : index
    %5 = vector.load %arg2[%c0, %c0_2] : memref<128x64xf32, #tpu.memory_space<vmem>>, vector<128x64xf32>
    %c0_3 = arith.constant 0 : index
    %c0_4 = arith.constant 0 : index
    %6 = vector.load %arg3[%c0_3, %c0_4] : memref<128x64xf32, #tpu.memory_space<vmem>>, vector<128x64xf32>
    %cst = arith.constant dense<0.000000e+00> : vector<128x128xf32>
    %7 = tpu.matmul %5, %6, %cst {dimension_numbers = #tpu.dot_dimension_numbers<[1], [1], [0], [0], [0, 0, 1, 0], [], []>} : vector<128x64xf32>, vector<128x64xf32>, vector<128x128xf32> -> vector<128x128xf32>
    %8 = arith.cmpi eq, %arg0, %arg1 : i32
    %c0_i32_5 = arith.constant 0 : i32
    %c1_i32 = arith.constant 1 : i32
    %9 = arith.select %8, %c0_i32_5, %c1_i32 : i32
    %10 = arith.index_cast %9 : i32 to index
    %c0_6 = arith.constant 0 : index
    %c0_7 = arith.constant 0 : index
    %11 = vector.load %arg4[%10, %c0_6, %c0_7] : memref<2x128x128xf32, #tpu.memory_space<vmem>>, vector<1x128x128xf32>
    %12 = vector.shape_cast %11 : vector<1x128x128xf32> to vector<128x128xf32>
    %13 = arith.mulf %7, %12 : vector<128x128xf32>
    %c0_8 = arith.constant 0 : index
    %c0_9 = arith.constant 0 : index
    %14 = vector.load %arg5[%c0_8, %c0_9] : memref<128x1xf32, #tpu.memory_space<vmem>>, vector<128x1xf32>
    %15 = vector.broadcast %14 : vector<128x1xf32> to vector<128x128xf32>
    %16 = arith.addf %13, %15 : vector<128x128xf32>
    %c0_10 = arith.constant 0 : index
    %c0_11 = arith.constant 0 : index
    %17 = vector.load %arg6[%c0_10, %c0_11] : memref<1x128xf32, #tpu.memory_space<vmem>>, vector<1x128xf32>
    %18 = vector.broadcast %17 : vector<1x128xf32> to vector<128x128xf32>
    %19 = arith.addf %16, %18 : vector<128x128xf32>
    %20 = arith.cmpi eq, %arg0, %arg1 : i32
    %21 = arith.extui %20 : i1 to i32
    %c0_i32_12 = arith.constant 0 : i32
    %22 = arith.cmpi ne, %21, %c0_i32_12 : i32
    scf.if %22 {
      %54 = arith.subf %7, %13 : vector<128x128xf32>
      %cst_33 = arith.constant 5.000000e-01 : f32
      %55 = vector.broadcast %cst_33 : f32 to vector<128x128xf32>
      %56 = arith.mulf %54, %55 : vector<128x128xf32>
      %cst_34 = arith.constant dense<0.000000e+00> : vector<128xf32>
      %57 = vector.multi_reduction <add>, %56, %cst_34 [1] : vector<128x128xf32> to vector<128xf32>
      %58 = vector.shape_cast %57 : vector<128xf32> to vector<128x1xf32>
      %c0_35 = arith.constant 0 : index
      %c0_36 = arith.constant 0 : index
      %59 = vector.load %arg10[%c0_35, %c0_36] : memref<128x1xf32, #tpu.memory_space<vmem>>, vector<128x1xf32>
      tpu.vector_store %arg10[%c0_35, %c0_36], %58 {strides = array<i32>} : memref<128x1xf32, #tpu.memory_space<vmem>>, vector<128x1xf32>,
      %cst_37 = arith.constant dense<0.000000e+00> : vector<128xf32>
      %60 = vector.multi_reduction <add>, %56, %cst_37 [0] : vector<128x128xf32> to vector<128xf32>
      %61 = vector.shape_cast %60 : vector<128xf32> to vector<1x128xf32>
      %62 = arith.index_cast %arg1 : i32 to index
      %c0_38 = arith.constant 0 : index
      %c0_39 = arith.constant 0 : index
      %63 = vector.load %arg11[%62, %c0_38, %c0_39] : memref<2x1x128xf32, #tpu.memory_space<vmem>>, vector<1x1x128xf32>
      %64 = vector.shape_cast %63 : vector<1x1x128xf32> to vector<1x128xf32>
      %65 = vector.shape_cast %61 : vector<1x128xf32> to vector<1x1x128xf32>
      tpu.vector_store %arg11[%62, %c0_38, %c0_39], %65 {strides = array<i32>} : memref<2x1x128xf32, #tpu.memory_space<vmem>>, vector<1x1x128xf32>,
    } else {
    }
    %c0_i32_13 = arith.constant 0 : i32
    %23 = arith.cmpi eq, %arg1, %c0_i32_13 : i32
    %24 = arith.extui %23 : i1 to i32
    %c0_i32_14 = arith.constant 0 : i32
    %25 = arith.cmpi ne, %24, %c0_i32_14 : i32
    scf.if %25 {
      %cst_33 = arith.constant -1.000000e+30 : f32
      %54 = vector.broadcast %cst_33 : f32 to vector<128x1xf32>
      %c0_34 = arith.constant 0 : index
      %c0_35 = arith.constant 0 : index
      %55 = vector.load %arg8[%c0_34, %c0_35] : memref<128x1xf32, #tpu.memory_space<vmem>>, vector<128x1xf32>
      tpu.vector_store %arg8[%c0_34, %c0_35], %54 {strides = array<i32>} : memref<128x1xf32, #tpu.memory_space<vmem>>, vector<128x1xf32>,
    } else {
    }
    %cst_15 = arith.constant dense<0xFF800000> : vector<128xf32>
    %26 = vector.multi_reduction <maximumf>, %19, %cst_15 [1] : vector<128x128xf32> to vector<128xf32>
    %27 = vector.shape_cast %26 : vector<128xf32> to vector<128x1xf32>
    %c0_16 = arith.constant 0 : index
    %c0_17 = arith.constant 0 : index
    %28 = vector.load %arg8[%c0_16, %c0_17] : memref<128x1xf32, #tpu.memory_space<vmem>>, vector<128x1xf32>
    %29 = tpu.concatenate %28, %27 in 1 : vector<128x1xf32>, vector<128x1xf32> -> vector<128x2xf32>
    %cst_18 = arith.constant dense<0xFF800000> : vector<128xf32>
    %30 = vector.multi_reduction <maximumf>, %29, %cst_18 [1] : vector<128x2xf32> to vector<128xf32>
    %31 = vector.shape_cast %30 : vector<128xf32> to vector<128x1xf32>
    %c0_19 = arith.constant 0 : index
    %c0_20 = arith.constant 0 : index
    %32 = vector.load %arg8[%c0_19, %c0_20] : memref<128x1xf32, #tpu.memory_space<vmem>>, vector<128x1xf32>
    tpu.vector_store %arg8[%c0_19, %c0_20], %31 {strides = array<i32>} : memref<128x1xf32, #tpu.memory_space<vmem>>, vector<128x1xf32>,
    %c1_i32_21 = arith.constant 1 : i32
    %33 = arith.cmpi eq, %arg1, %c1_i32_21 : i32
    %34 = arith.extui %33 : i1 to i32
    %c0_i32_22 = arith.constant 0 : i32
    %35 = arith.cmpi ne, %34, %c0_i32_22 : i32
    scf.if %35 {
      %c0_33 = arith.constant 0 : index
      %c0_34 = arith.constant 0 : index
      %54 = vector.load %arg10[%c0_33, %c0_34] : memref<128x1xf32, #tpu.memory_space<vmem>>, vector<128x1xf32>
      %cst_35 = arith.constant 2.000000e-01 : f32
      %55 = vector.broadcast %cst_35 : f32 to vector<128x1xf32>
      %56 = arith.subf %55, %54 : vector<128x1xf32>
      %57 = arith.addf %31, %56 : vector<128x1xf32>
      %cst_36 = arith.constant 0.000000e+00 : f32
      %58 = vector.broadcast %cst_36 : f32 to vector<128x1xf32>
      %59 = arith.maximumf %57, %58 : vector<128x1xf32>
      %cst_37 = arith.constant dense<0.000000e+00> : vector<128xf32>
      %60 = vector.multi_reduction <add>, %59, %cst_37 [1] : vector<128x1xf32> to vector<128xf32>
      %61 = vector.shape_cast %60 : vector<128xf32> to vector<128x1xf32>
      %cst_38 = arith.constant dense<0.000000e+00> : vector<1xf32>
      %62 = vector.multi_reduction <add>, %61, %cst_38 [0] : vector<128x1xf32> to vector<1xf32>
      %63 = vector.shape_cast %62 : vector<1xf32> to vector<1x1xf32>
      %c0_39 = arith.constant 0 : index
      %c0_40 = arith.constant 0 : index
      %64 = vector.load %arg7[%c0_39, %c0_40] : memref<1x1xf32, #tpu.memory_space<vmem>>, vector<1x1xf32>
      %65 = arith.addf %64, %63 : vector<1x1xf32>
      %c0_41 = arith.constant 0 : index
      %c0_42 = arith.constant 0 : index
      %66 = vector.load %arg7[%c0_41, %c0_42] : memref<1x1xf32, #tpu.memory_space<vmem>>, vector<1x1xf32>
      tpu.vector_store %arg7[%c0_41, %c0_42], %65 {strides = array<i32>} : memref<1x1xf32, #tpu.memory_space<vmem>>, vector<1x1xf32>,
    } else {
    }
    %c0_i32_23 = arith.constant 0 : i32
    %36 = arith.cmpi eq, %arg0, %c0_i32_23 : i32
    %37 = arith.extui %36 : i1 to i32
    %c0_i32_24 = arith.constant 0 : i32
    %38 = arith.cmpi ne, %37, %c0_i32_24 : i32
    scf.if %38 {
      %cst_33 = arith.constant -1.000000e+30 : f32
      %54 = vector.broadcast %cst_33 : f32 to vector<1x128xf32>
      %55 = arith.index_cast %arg1 : i32 to index
      %c0_34 = arith.constant 0 : index
      %c0_35 = arith.constant 0 : index
      %56 = vector.load %arg9[%55, %c0_34, %c0_35] : memref<2x1x128xf32, #tpu.memory_space<vmem>>, vector<1x1x128xf32>
      %57 = vector.shape_cast %56 : vector<1x1x128xf32> to vector<1x128xf32>
      %58 = vector.shape_cast %54 : vector<1x128xf32> to vector<1x1x128xf32>
      tpu.vector_store %arg9[%55, %c0_34, %c0_35], %58 {strides = array<i32>} : memref<2x1x128xf32, #tpu.memory_space<vmem>>, vector<1x1x128xf32>,
    } else {
    }
    %cst_25 = arith.constant dense<0xFF800000> : vector<128xf32>
    %39 = vector.multi_reduction <maximumf>, %19, %cst_25 [0] : vector<128x128xf32> to vector<128xf32>
    %40 = vector.shape_cast %39 : vector<128xf32> to vector<1x128xf32>
    %41 = arith.index_cast %arg1 : i32 to index
    %c0_26 = arith.constant 0 : index
    %c0_27 = arith.constant 0 : index
    %42 = vector.load %arg9[%41, %c0_26, %c0_27] : memref<2x1x128xf32, #tpu.memory_space<vmem>>, vector<1x1x128xf32>
    %43 = vector.shape_cast %42 : vector<1x1x128xf32> to vector<1x128xf32>
    %44 = tpu.concatenate %43, %40 in 0 : vector<1x128xf32>, vector<1x128xf32> -> vector<2x128xf32>
    %cst_28 = arith.constant dense<0xFF800000> : vector<128xf32>
    %45 = vector.multi_reduction <maximumf>, %44, %cst_28 [0] : vector<2x128xf32> to vector<128xf32>
    %46 = vector.shape_cast %45 : vector<128xf32> to vector<1x128xf32>
    %47 = arith.index_cast %arg1 : i32 to index
    %c0_29 = arith.constant 0 : index
    %c0_30 = arith.constant 0 : index
    %48 = vector.load %arg9[%47, %c0_29, %c0_30] : memref<2x1x128xf32, #tpu.memory_space<vmem>>, vector<1x1x128xf32>
    %49 = vector.shape_cast %48 : vector<1x1x128xf32> to vector<1x128xf32>
    %50 = vector.shape_cast %46 : vector<1x128xf32> to vector<1x1x128xf32>
    tpu.vector_store %arg9[%47, %c0_29, %c0_30], %50 {strides = array<i32>} : memref<2x1x128xf32, #tpu.memory_space<vmem>>, vector<1x1x128xf32>,
    %c1_i32_31 = arith.constant 1 : i32
    %51 = arith.cmpi eq, %arg0, %c1_i32_31 : i32
    %52 = arith.extui %51 : i1 to i32
    %c0_i32_32 = arith.constant 0 : i32
    %53 = arith.cmpi ne, %52, %c0_i32_32 : i32
    scf.if %53 {
      %54 = arith.index_cast %arg1 : i32 to index
      %c0_33 = arith.constant 0 : index
      %c0_34 = arith.constant 0 : index
      %55 = vector.load %arg11[%54, %c0_33, %c0_34] : memref<2x1x128xf32, #tpu.memory_space<vmem>>, vector<1x1x128xf32>
      %56 = vector.shape_cast %55 : vector<1x1x128xf32> to vector<1x128xf32>
      %cst_35 = arith.constant 2.000000e-01 : f32
      %57 = vector.broadcast %cst_35 : f32 to vector<1x128xf32>
      %58 = arith.subf %57, %56 : vector<1x128xf32>
      %59 = arith.addf %46, %58 : vector<1x128xf32>
      %cst_36 = arith.constant 0.000000e+00 : f32
      %60 = vector.broadcast %cst_36 : f32 to vector<1x128xf32>
      %61 = arith.maximumf %59, %60 : vector<1x128xf32>
      %cst_37 = arith.constant dense<0.000000e+00> : vector<1xf32>
      %62 = vector.multi_reduction <add>, %61, %cst_37 [1] : vector<1x128xf32> to vector<1xf32>
      %63 = vector.shape_cast %62 : vector<1xf32> to vector<1x1xf32>
      %cst_38 = arith.constant dense<0.000000e+00> : vector<1xf32>
      %64 = vector.multi_reduction <add>, %63, %cst_38 [0] : vector<1x1xf32> to vector<1xf32>
      %65 = vector.shape_cast %64 : vector<1xf32> to vector<1x1xf32>
      %c0_39 = arith.constant 0 : index
      %c0_40 = arith.constant 0 : index
      %66 = vector.load %arg7[%c0_39, %c0_40] : memref<1x1xf32, #tpu.memory_space<vmem>>, vector<1x1xf32>
      %67 = arith.addf %66, %65 : vector<1x1xf32>
      %c0_41 = arith.constant 0 : index
      %c0_42 = arith.constant 0 : index
      %68 = vector.load %arg7[%c0_41, %c0_42] : memref<1x1xf32, #tpu.memory_space<vmem>>, vector<1x1xf32>
      tpu.vector_store %arg7[%c0_41, %c0_42], %67 {strides = array<i32>} : memref<1x1xf32, #tpu.memory_space<vmem>>, vector<1x1xf32>,
    } else {
    }
    return
  }
  func.func @transform_0(%arg0: i32, %arg1: i32) -> (i32, i32) {
    %c0_i32 = arith.constant 0 : i32
    %c0_i32_0 = arith.constant 0 : i32
    return %arg0, %c0_i32 : i32, i32
  }
  func.func @transform_1(%arg0: i32, %arg1: i32) -> (i32, i32) {
    %c0_i32 = arith.constant 0 : i32
    %c0_i32_0 = arith.constant 0 : i32
    return %arg1, %c0_i32 : i32, i32
  }
  func.func @transform_2(%arg0: i32, %arg1: i32) -> (i32, i32, i32) {
    %c0_i32 = arith.constant 0 : i32
    %c0_i32_0 = arith.constant 0 : i32
    %c0_i32_1 = arith.constant 0 : i32
    %c0_i32_2 = arith.constant 0 : i32
    return %c0_i32, %c0_i32_0, %c0_i32_1 : i32, i32, i32
  }
  func.func @transform_3(%arg0: i32, %arg1: i32) -> (i32, i32) {
    %c0_i32 = arith.constant 0 : i32
    %c0_i32_0 = arith.constant 0 : i32
    return %arg0, %c0_i32 : i32, i32
  }
  func.func @transform_4(%arg0: i32, %arg1: i32) -> (i32, i32) {
    %c0_i32 = arith.constant 0 : i32
    %c0_i32_0 = arith.constant 0 : i32
    return %c0_i32, %arg1 : i32, i32
  }
  func.func @transform_5(%arg0: i32, %arg1: i32) -> (i32, i32) {
    %c0_i32 = arith.constant 0 : i32
    %c0_i32_0 = arith.constant 0 : i32
    %c0_i32_1 = arith.constant 0 : i32
    return %c0_i32, %c0_i32_0 : i32, i32
  }
}

</mosaic_0001>

<llo_original>
// kernel: tpu_custom_call.1
$region0: #{tpu_custom_call.1}
  #allocation0 [shape = 'u32[]', space=smem, size = 0x4, offset = 0x4, fixed_abs, tag = 'smem constant byte address 0x4 - core index']
  #allocation1 [shape = 'u32[72,128]{1,0:T(1,128)}', space=vmem, size = 0x9000, scoped, tag = 'internal scratch']
  #allocation2 [shape = 'f32[128,1]{1,0:T(8,128)}', space=vmem, size = 0x10000, scoped, tag = 'scratch operand']
  #allocation3 [shape = 'f32[2,1,128]{2,1,0:T(1,128)}', space=vmem, size = 0x400, scoped, tag = 'scratch operand']
  #allocation4 [shape = 'f32[128,1]{1,0:T(8,128)}', space=vmem, size = 0x10000, scoped, tag = 'scratch operand']
  #allocation5 [shape = 'f32[2,1,128]{2,1,0:T(1,128)}', space=vmem, size = 0x400, scoped, tag = 'scratch operand']
  %s0 = inlined_call_operand.vmem [shape: f32[256,64], index: 0, kind: input, shape index: {}]
  %s1 = inlined_call_operand.vmem [shape: f32[256,64], index: 1, kind: input, shape index: {}]
  %s2 = inlined_call_operand.vmem [shape: f32[2,128,128], index: 2, kind: input, shape index: {}]
  %s3 = inlined_call_operand.vmem [shape: f32[256,1], index: 3, kind: input, shape index: {}]
  %s4 = inlined_call_operand.vmem [shape: f32[1,256], index: 4, kind: input, shape index: {}]
  %s5 = inlined_call_operand.hbm [shape: f32[1,1], index: 5, kind: output, shape index: {}]
  %s6 = sld [smem:[#allocation0]]
  $region77: #{tpu_custom_call.1} parent=0
    _
  %s8 = ssub.s32 1, %s6
  %s9 = scalar_select 0, %s8, %s6
  $region1: #{tpu_custom_call.1} parent=0
    #allocation6 [shape = 'u8[512]{0}', space=vmem, size = 0x400, scoped, tag = 'output window, operand 0, single buffered']
    #allocation7 [shape = 's32[2]{0}', space=sflag, size = 0x8, scoped, tag = 'scoped memory for tpu_custom_call.1']
    %10 = vsyncpa [#allocation7], 0
    loop: start=0, step=1, limit=6
    $region2: #{tpu_custom_call.1} parent=1 // loop_pre_header
      _
    $region3: #{tpu_custom_call.1} parent=1 // loop_header
      %s12 = sphi 0, %s16
      %p13 = scmp.ge.s32.totalorder %s12, 6
      %s19 = sphi 0, %s31
      %s20 = sphi 0, %s27
      %s21 = sphi 0, %s19
      %s22 = sphi 0, %s20
      %s23 = sphi 0, %s21
      %s24 = sphi 0, %s22
      %s34 = sphi 0, %s36
      %s37 = sphi 0, %s34
      %s38 = sphi 0, %s37
      %s54 = sphi 0, %s38
      %s60 = sphi 0, %s62
      %s63 = sphi 0, %s60
      %s64 = sphi 0, %s63
      %s80 = sphi 0, %s64
      %s84 = sphi 0, %s84
      %s86 = sphi 0, %s84
      %s87 = sphi 0, %s86
      %s101 = sphi 0, %s87
      %s107 = sphi 0, %s109
      %s110 = sphi 0, %s107
      %s111 = sphi 0, %s110
      %s127 = sphi 0, %s111
      %s133 = sphi 0, %s135
      %s136 = sphi 0, %s133
      %s137 = sphi 0, %s136
      %s153 = sphi 0, %s137
      %s157 = sphi 0, %s157
      %s159 = sphi 0, %s157
      %s160 = sphi 0, %s159
      %s174 = sphi 0, %s160
    $region4: #{tpu_custom_call.1} parent=1 // loop_header_branch
      %15 = sbr.rel (%p13) target = $region8
    $region5: #{tpu_custom_call.1} parent=1 // loop_body
      %s17 = ssub.s32 %s12, 1
      %s18 = ssub.s32 %s12, 2
      %s25 = sadd.s32 1, %s20
      %p26 = scmp.ge.s32.totalorder %s25, 2
      %s27 = scalar_select %p26, 0, %s25
      %s28 = sadd.s32 1, %s19
      %s29 = scalar_select %p26, %s28, %s19
      %p30 = scmp.ge.s32.totalorder %s29, 2
      %s31 = scalar_select %p30, 0, %s29
      %s32 = ssub.s32 %s19, %s31
      %p33 = scmp.eq.s32.totalorder %s32, 0
      %s35 = sadd.s32 %s34, 1
      %s36 = scalar_select %p33, %s34, %s35
      %p39 = pneg %p33
      %p40 = scmp.eq.s32.totalorder %s12, 3
      %p41 = por %p39, %p40
      %p42 = scmp.ne.s32.totalorder %s34, %s37
      %p43 = scmp.eq.s32.totalorder %s12, 0
      %p44 = por %p42, %p43
      %p45 = scmp.ne.s32.totalorder %s34, %s37
      %p46 = scmp.eq.s32.totalorder %s17, 3
      %p47 = por %p45, %p46
      %p48 = scmp.ne.s32.totalorder %s37, %s38
      %p49 = scmp.eq.s32.totalorder %s17, 0
      %p50 = por %p48, %p49
      %p51 = scmp.ne.s32.totalorder %s37, %s38
      %p52 = scmp.eq.s32.totalorder %s18, 3
      %p53 = por %p51, %p52
      %p55 = scmp.ne.s32.totalorder %s38, %s54
      %p56 = scmp.eq.s32.totalorder %s18, 0
      %p57 = por %p55, %p56
      %s58 = ssub.s32 %s20, %s27
      %p59 = scmp.eq.s32.totalorder %s58, 0
      %s61 = sadd.s32 %s60, 1
      %s62 = scalar_select %p59, %s60, %s61
      %p65 = pneg %p59
      %p66 = scmp.eq.s32.totalorder %s12, 3
      %p67 = por %p65, %p66
      %p68 = scmp.ne.s32.totalorder %s60, %s63
      %p69 = scmp.eq.s32.totalorder %s12, 0
      %p70 = por %p68, %p69
      %p71 = scmp.ne.s32.totalorder %s60, %s63
      %p72 = scmp.eq.s32.totalorder %s17, 3
      %p73 = por %p71, %p72
      %p74 = scmp.ne.s32.totalorder %s63, %s64
      %p75 = scmp.eq.s32.totalorder %s17, 0
      %p76 = por %p74, %p75
      %p77 = scmp.ne.s32.totalorder %s63, %s64
      %p78 = scmp.eq.s32.totalorder %s18, 3
      %p79 = por %p77, %p78
      %p81 = scmp.ne.s32.totalorder %s64, %s80
      %p82 = scmp.eq.s32.totalorder %s18, 0
      %p83 = por %p81, %p82
      %s85 = sadd.s32 %s84, 1
      %p88 = scmp.eq.s32.totalorder %s12, 3
      %p89 = scmp.ne.s32.totalorder %s84, %s86
      %p90 = scmp.eq.s32.totalorder %s12, 0
      %p91 = por %p89, %p90
      %p92 = scmp.ne.s32.totalorder %s84, %s86
      %p93 = scmp.eq.s32.totalorder %s17, 3
      %p94 = por %p92, %p93
      %p95 = scmp.ne.s32.totalorder %s86, %s87
      %p96 = scmp.eq.s32.totalorder %s17, 0
      %p97 = por %p95, %p96
      %p98 = scmp.ne.s32.totalorder %s86, %s87
      %p99 = scmp.eq.s32.totalorder %s18, 3
      %p100 = por %p98, %p99
      %p102 = scmp.ne.s32.totalorder %s87, %s101
      %p103 = scmp.eq.s32.totalorder %s18, 0
      %p104 = por %p102, %p103
      %s105 = ssub.s32 %s19, %s31
      %p106 = scmp.eq.s32.totalorder %s105, 0
      %s108 = sadd.s32 %s107, 1
      %s109 = scalar_select %p106, %s107, %s108
      %p112 = pneg %p106
      %p113 = scmp.eq.s32.totalorder %s12, 3
      %p114 = por %p112, %p113
      %p115 = scmp.ne.s32.totalorder %s107, %s110
      %p116 = scmp.eq.s32.totalorder %s12, 0
      %p117 = por %p115, %p116
      %p118 = scmp.ne.s32.totalorder %s107, %s110
      %p119 = scmp.eq.s32.totalorder %s17, 3
      %p120 = por %p118, %p119
      %p121 = scmp.ne.s32.totalorder %s110, %s111
      %p122 = scmp.eq.s32.totalorder %s17, 0
      %p123 = por %p121, %p122
      %p124 = scmp.ne.s32.totalorder %s110, %s111
      %p125 = scmp.eq.s32.totalorder %s18, 3
      %p126 = por %p124, %p125
      %p128 = scmp.ne.s32.totalorder %s111, %s127
      %p129 = scmp.eq.s32.totalorder %s18, 0
      %p130 = por %p128, %p129
      %s131 = ssub.s32 %s20, %s27
      %p132 = scmp.eq.s32.totalorder %s131, 0
      %s134 = sadd.s32 %s133, 1
      %s135 = scalar_select %p132, %s133, %s134
      %p138 = pneg %p132
      %p139 = scmp.eq.s32.totalorder %s12, 3
      %p140 = por %p138, %p139
      %p141 = scmp.ne.s32.totalorder %s133, %s136
      %p142 = scmp.eq.s32.totalorder %s12, 0
      %p143 = por %p141, %p142
      %p144 = scmp.ne.s32.totalorder %s133, %s136
      %p145 = scmp.eq.s32.totalorder %s17, 3
      %p146 = por %p144, %p145
      %p147 = scmp.ne.s32.totalorder %s136, %s137
      %p148 = scmp.eq.s32.totalorder %s17, 0
      %p149 = por %p147, %p148
      %p150 = scmp.ne.s32.totalorder %s136, %s137
      %p151 = scmp.eq.s32.totalorder %s18, 3
      %p152 = por %p150, %p151
      %p154 = scmp.ne.s32.totalorder %s137, %s153
      %p155 = scmp.eq.s32.totalorder %s18, 0
      %p156 = por %p154, %p155
      %s158 = sadd.s32 %s157, 1
      %p161 = scmp.eq.s32.totalorder %s12, 3
      %p162 = scmp.ne.s32.totalorder %s157, %s159
      %p163 = scmp.eq.s32.totalorder %s12, 0
      %p164 = por %p162, %p163
      %p165 = scmp.ne.s32.totalorder %s157, %s159
      %p166 = scmp.eq.s32.totalorder %s17, 3
      %p167 = por %p165, %p166
      %p168 = scmp.ne.s32.totalorder %s159, %s160
      %p169 = scmp.eq.s32.totalorder %s17, 0
      %p170 = por %p168, %p169
      %p171 = scmp.ne.s32.totalorder %s159, %s160
      %p172 = scmp.eq.s32.totalorder %s18, 3
      %p173 = por %p171, %p172
      %p175 = scmp.ne.s32.totalorder %s160, %s174
      %p176 = scmp.eq.s32.totalorder %s18, 0
      %p177 = por %p175, %p176
      %p178 = scmp.le.s32.totalorder 1, %s12
      %p179 = scmp.lt.s32.totalorder %s12, 5
      %p180 = pnand %p178, %p179
      %p181 = pneg %p180
      // Predicated region
      $region9: #{tpu_custom_call.1} parent=5 // pred_check
        _
      $region10: #{tpu_custom_call.1} parent=5 // pred_check_branch
        %183 = sbr.rel (%p180) target = $region12
      $region11: #{tpu_custom_call.1} parent=5 // pred_region
        %s184 = ssub.s32 %s12, 1
        // Predicated region
        $region13: #{tpu_custom_call.1} parent=11 // pred_check
          %p185 = pneg %p97
        $region14: #{tpu_custom_call.1} parent=11 // pred_check_branch
          %187 = sbr.rel (%p185) target = $region16
        $region15: #{tpu_custom_call.1} parent=11 // pred_region
          _
        $region16: #{tpu_custom_call.1} parent=11 // pred_fallthru
          _
      $region12: #{tpu_custom_call.1} parent=5 // pred_fallthru
        _
      %p188 = scmp.lt.s32.totalorder %s12, 4
      // Predicated region
      $region17: #{tpu_custom_call.1} parent=5 // pred_check
        %p189 = pneg %p188
      $region18: #{tpu_custom_call.1} parent=5 // pred_check_branch
        %191 = sbr.rel (%p189) target = $region20
      $region19: #{tpu_custom_call.1} parent=5 // pred_region
        // Predicated region
        $region21: #{tpu_custom_call.1} parent=19 // pred_check
          %p192 = pneg %p44
        $region22: #{tpu_custom_call.1} parent=19 // pred_check_branch
          %194 = sbr.rel (%p192) target = $region24
        $region23: #{tpu_custom_call.1} parent=19 // pred_region
          %s195 = smul.u32 16, %s19
          %p196 = scmp.lt.s32.totalorder %s195, 31
          %s197 = scalar_select %p196, %s195, 31
          %s198 = smul.addr %s197, 8
          %s199 = scalar_lea.vmem %s0, %s198
          %s200 = smul.u32 16, %s19
        $region24: #{tpu_custom_call.1} parent=19 // pred_fallthru
          _
        // Predicated region
        $region25: #{tpu_custom_call.1} parent=19 // pred_check
          %p201 = pneg %p70
        $region26: #{tpu_custom_call.1} parent=19 // pred_check_branch
          %203 = sbr.rel (%p201) target = $region28
        $region27: #{tpu_custom_call.1} parent=19 // pred_region
          %s204 = smul.u32 16, %s20
          %p205 = scmp.lt.s32.totalorder %s204, 31
          %s206 = scalar_select %p205, %s204, 31
          %s207 = smul.addr %s206, 8
          %s208 = scalar_lea.vmem %s1, %s207
          %s209 = smul.u32 16, %s20
        $region28: #{tpu_custom_call.1} parent=19 // pred_fallthru
          _
        // Predicated region
        $region29: #{tpu_custom_call.1} parent=19 // pred_check
          %p210 = pneg %p117
        $region30: #{tpu_custom_call.1} parent=19 // pred_check_branch
          %212 = sbr.rel (%p210) target = $region32
        $region31: #{tpu_custom_call.1} parent=19 // pred_region
          %s213 = smul.u32 16, %s19
          %p214 = scmp.lt.s32.totalorder %s213, 31
          %s215 = scalar_select %p214, %s213, 31
          %s216 = smul.addr %s215, 8
          %s217 = scalar_lea.vmem %s3, %s216
          %s218 = smul.u32 16, %s19
        $region32: #{tpu_custom_call.1} parent=19 // pred_fallthru
          _
        // Predicated region
        $region33: #{tpu_custom_call.1} parent=19 // pred_check
          %p219 = pneg %p143
        $region34: #{tpu_custom_call.1} parent=19 // pred_check_branch
          %221 = sbr.rel (%p219) target = $region36
        $region35: #{tpu_custom_call.1} parent=19 // pred_region
          %p222 = scmp.lt.s32.totalorder %s20, 1
          %s223 = scalar_select %p222, %s20, 1
          %s224 = scalar_lea.vmem %s4, %s223
        $region36: #{tpu_custom_call.1} parent=19 // pred_fallthru
          _
      $region20: #{tpu_custom_call.1} parent=5 // pred_fallthru
        _
      %p225 = scmp.le.s32.totalorder 1, %s12
      %p226 = scmp.lt.s32.totalorder %s12, 5
      %p227 = pnand %p225, %p226
      %p228 = pneg %p227
      // Predicated region
      $region37: #{tpu_custom_call.1} parent=5 // pred_check
        _
      $region38: #{tpu_custom_call.1} parent=5 // pred_check_branch
        %230 = sbr.rel (%p227) target = $region40
      $region39: #{tpu_custom_call.1} parent=5 // pred_region
        %s231 = ssub.s32 %s12, 1
        %s232 = smul.u32 16, %s21
        %p233 = scmp.lt.s32.totalorder %s232, 31
        %s234 = scalar_select %p233, %s232, 31
        %s235 = smul.addr %s234, 8
        %s236 = scalar_lea.vmem %s0, %s235
        %p237 = pneg %p50
        %p238 = pneg %p47
        %s239 = smul.u32 16, %s22
        %p240 = scmp.lt.s32.totalorder %s239, 31
        %s241 = scalar_select %p240, %s239, 31
        %s242 = smul.addr %s241, 8
        %s243 = scalar_lea.vmem %s1, %s242
        %p244 = pneg %p76
        %p245 = pneg %p73
        %p246 = pneg %p97
        %p247 = pneg %p94
        %s248 = smul.u32 16, %s21
        %p249 = scmp.lt.s32.totalorder %s248, 31
        %s250 = scalar_select %p249, %s248, 31
        %s251 = smul.addr %s250, 8
        %s252 = scalar_lea.vmem %s3, %s251
        %p253 = pneg %p123
        %p254 = pneg %p120
        %p255 = scmp.lt.s32.totalorder %s22, 1
        %s256 = scalar_select %p255, %s22, 1
        %s257 = scalar_lea.vmem %s4, %s256
        %p258 = pneg %p149
        %p259 = pneg %p146
        %p260 = pneg %p170
        %p261 = pneg %p167
        %s262 = smul.u32 16, %s21
        %p263 = scmp.lt.s32.totalorder %s262, 31
        %s264 = scalar_select %p263, %s262, 31
        %s265 = smul.addr %s264, 8
        %s266 = scalar_lea.vmem %s0, %s265
        %s267 = smul.u32 16, %s21
        %s268 = smul.u32 16, %s22
        %p269 = scmp.lt.s32.totalorder %s268, 31
        %s270 = scalar_select %p269, %s268, 31
        %s271 = smul.addr %s270, 8
        %s272 = scalar_lea.vmem %s1, %s271
        %s273 = smul.u32 16, %s22
        %s274 = smul.u32 16, %s21
        %p275 = scmp.lt.s32.totalorder %s274, 31
        %s276 = scalar_select %p275, %s274, 31
        %s277 = smul.addr %s276, 8
        %s278 = scalar_lea.vmem %s3, %s277
        %s279 = smul.u32 16, %s21
        %p280 = scmp.lt.s32.totalorder %s22, 1
        %s281 = scalar_select %p280, %s22, 1
        %s282 = scalar_lea.vmem %s4, %s281
        %p283 = scmp.eq.s32.totalorder %s21, 0
        %p284 = scmp.eq.s32.totalorder %s22, 0
        %p285 = pnand %p283, %p284
        %p286 = pneg %p285
        // Predicated region
        $region41: #{tpu_custom_call.1} parent=39 // pred_check
          _
        $region42: #{tpu_custom_call.1} parent=39 // pred_check_branch
          %288 = sbr.rel (%p285) target = $region44
        $region43: #{tpu_custom_call.1} parent=39 // pred_region
          %vm289 = vcmask 0
          %290 = vst.msk [vmem:[#allocation6] sm:$0x1] %vm289, 0.0
        $region44: #{tpu_custom_call.1} parent=39 // pred_fallthru
          _
        %v291 = vld [vmem:[%s266] sm:$0xff]
        %v292 = vld [vmem:[%s266 + $0x8] sm:$0xff]
        %v293 = vld [vmem:[%s266 + $0x10] sm:$0xff]
        %v294 = vld [vmem:[%s266 + $0x18] sm:$0xff]
        %v295 = vld [vmem:[%s266 + $0x20] sm:$0xff]
        %v296 = vld [vmem:[%s266 + $0x28] sm:$0xff]
        %v297 = vld [vmem:[%s266 + $0x30] sm:$0xff]
        %v298 = vld [vmem:[%s266 + $0x38] sm:$0xff]
        %v299 = vld [vmem:[%s266 + $0x40] sm:$0xff]
        %v300 = vld [vmem:[%s266 + $0x48] sm:$0xff]
        %v301 = vld [vmem:[%s266 + $0x50] sm:$0xff]
        %v302 = vld [vmem:[%s266 + $0x58] sm:$0xff]
        %v303 = vld [vmem:[%s266 + $0x60] sm:$0xff]
        %v304 = vld [vmem:[%s266 + $0x68] sm:$0xff]
        %v305 = vld [vmem:[%s266 + $0x70] sm:$0xff]
        %v306 = vld [vmem:[%s266 + $0x78] sm:$0xff]
        %v307 = vld [vmem:[%s272] sm:$0xff]
        %v308 = vld [vmem:[%s272 + $0x8] sm:$0xff]
        %v309 = vld [vmem:[%s272 + $0x10] sm:$0xff]
        %v310 = vld [vmem:[%s272 + $0x18] sm:$0xff]
        %v311 = vld [vmem:[%s272 + $0x20] sm:$0xff]
        %v312 = vld [vmem:[%s272 + $0x28] sm:$0xff]
        %v313 = vld [vmem:[%s272 + $0x30] sm:$0xff]
        %v314 = vld [vmem:[%s272 + $0x38] sm:$0xff]
        %v315 = vld [vmem:[%s272 + $0x40] sm:$0xff]
        %v316 = vld [vmem:[%s272 + $0x48] sm:$0xff]
        %v317 = vld [vmem:[%s272 + $0x50] sm:$0xff]
        %v318 = vld [vmem:[%s272 + $0x58] sm:$0xff]
        %v319 = vld [vmem:[%s272 + $0x60] sm:$0xff]
        %v320 = vld [vmem:[%s272 + $0x68] sm:$0xff]
        %v321 = vld [vmem:[%s272 + $0x70] sm:$0xff]
        %v322 = vld [vmem:[%s272 + $0x78] sm:$0xff]
        %vm323 = vcmask 523264
        %v325 = vsel %vm323, %v291, 0
        %v328 = vsel %vm323, %v292, 0
        %v331 = vsel %vm323, %v293, 0
        %v334 = vsel %vm323, %v294, 0
        %v337 = vsel %vm323, %v295, 0
        %v340 = vsel %vm323, %v296, 0
        %v343 = vsel %vm323, %v297, 0
        %v346 = vsel %vm323, %v298, 0
        %v349 = vsel %vm323, %v299, 0
        %v352 = vsel %vm323, %v300, 0
        %v355 = vsel %vm323, %v301, 0
        %v358 = vsel %vm323, %v302, 0
        %v361 = vsel %vm323, %v303, 0
        %v364 = vsel %vm323, %v304, 0
        %v367 = vsel %vm323, %v305, 0
        %v370 = vsel %vm323, %v306, 0
        %v373 = vsel %vm323, %v307, 0
        %v376 = vsel %vm323, %v308, 0
        %v379 = vsel %vm323, %v309, 0
        %v382 = vsel %vm323, %v310, 0
        %v385 = vsel %vm323, %v311, 0
        %v388 = vsel %vm323, %v312, 0
        %v391 = vsel %vm323, %v313, 0
        %v394 = vsel %vm323, %v314, 0
        %v397 = vsel %vm323, %v315, 0
        %v400 = vsel %vm323, %v316, 0
        %v403 = vsel %vm323, %v317, 0
        %v406 = vsel %vm323, %v318, 0
        %v409 = vsel %vm323, %v319, 0
        %v412 = vsel %vm323, %v320, 0
        %v415 = vsel %vm323, %v321, 0
        %v418 = vsel %vm323, %v322, 0
        %420 = vmatpush.xpose.msra.mxu0 %v418
        %421 = vmatpush.xpose.msra.mxu0 %v415
        %422 = vmatpush.xpose.msra.mxu0 %v412
        %423 = vmatpush.xpose.msra.mxu0 %v409
        %424 = vmatpush.xpose.msra.mxu0 %v406
        %425 = vmatpush.xpose.msra.mxu0 %v403
        %426 = vmatpush.xpose.msra.mxu0 %v400
        %427 = vmatpush.xpose.msra.mxu0 %v397
        %428 = vmatpush.xpose.msra.mxu0 %v394
        %429 = vmatpush.xpose.msra.mxu0 %v391
        %430 = vmatpush.xpose.msra.mxu0 %v388
        %431 = vmatpush.xpose.msra.mxu0 %v385
        %432 = vmatpush.xpose.msra.mxu0 %v382
        %433 = vmatpush.xpose.msra.mxu0 %v379
        %434 = vmatpush.xpose.msra.mxu0 %v376
        %435 = vmatpush.xpose.msra.mxu0 %v373
        %436 = vmatmul.f32.gmra.mxu0 %v325
        %v437 = vpop.f32.mrf.mxu0
        %v438 = vadd.f32 0.0, %v437
        %439 = vmatmul.f32.gmra.mxu0 %v328
        %v440 = vpop.f32.mrf.mxu0
        %v441 = vadd.f32 0.0, %v440
        %442 = vmatmul.f32.gmra.mxu0 %v331
        %v443 = vpop.f32.mrf.mxu0
        %v444 = vadd.f32 0.0, %v443
        %445 = vmatmul.f32.gmra.mxu0 %v334
        %v446 = vpop.f32.mrf.mxu0
        %v447 = vadd.f32 0.0, %v446
        %448 = vmatmul.f32.gmra.mxu0 %v337
        %v449 = vpop.f32.mrf.mxu0
        %v450 = vadd.f32 0.0, %v449
        %451 = vmatmul.f32.gmra.mxu0 %v340
        %v452 = vpop.f32.mrf.mxu0
        %v453 = vadd.f32 0.0, %v452
        %454 = vmatmul.f32.gmra.mxu0 %v343
        %v455 = vpop.f32.mrf.mxu0
        %v456 = vadd.f32 0.0, %v455
        %457 = vmatmul.f32.gmra.mxu0 %v346
        %v458 = vpop.f32.mrf.mxu0
        %v459 = vadd.f32 0.0, %v458
        %460 = vmatmul.f32.gmra.mxu0 %v349
        %v461 = vpop.f32.mrf.mxu0
        %v462 = vadd.f32 0.0, %v461
        %463 = vmatmul.f32.gmra.mxu0 %v352
        %v464 = vpop.f32.mrf.mxu0
        %v465 = vadd.f32 0.0, %v464
        %466 = vmatmul.f32.gmra.mxu0 %v355
        %v467 = vpop.f32.mrf.mxu0
        %v468 = vadd.f32 0.0, %v467
        %469 = vmatmul.f32.gmra.mxu0 %v358
        %v470 = vpop.f32.mrf.mxu0
        %v471 = vadd.f32 0.0, %v470
        %472 = vmatmul.f32.gmra.mxu0 %v361
        %v473 = vpop.f32.mrf.mxu0
        %v474 = vadd.f32 0.0, %v473
        %475 = vmatmul.f32.gmra.mxu0 %v364
        %v476 = vpop.f32.mrf.mxu0
        %v477 = vadd.f32 0.0, %v476
        %478 = vmatmul.f32.gmra.mxu0 %v367
        %v479 = vpop.f32.mrf.mxu0
        %v480 = vadd.f32 0.0, %v479
        %481 = vmatmul.f32.gmra.mxu0 %v370
        %v482 = vpop.f32.mrf.mxu0
        %v483 = vadd.f32 0.0, %v482
        %484 = vdwg.mxu0
        %p485 = scmp.ne.s32.totalorder %s21, %s22
        %s486 = scalar_select %p485, 1, 0
        %s487 = smul.u32 %s486, 128
        %s488 = scalar_lea.vmem %s2, %s487
        %v489 = vld [vmem:[%s488] sm:$0xff]
        %v490 = vld [vmem:[%s488 + $0x8] sm:$0xff]
        %v491 = vld [vmem:[%s488 + $0x10] sm:$0xff]
        %v492 = vld [vmem:[%s488 + $0x18] sm:$0xff]
        %v493 = vld [vmem:[%s488 + $0x20] sm:$0xff]
        %v494 = vld [vmem:[%s488 + $0x28] sm:$0xff]
        %v495 = vld [vmem:[%s488 + $0x30] sm:$0xff]
        %v496 = vld [vmem:[%s488 + $0x38] sm:$0xff]
        %v497 = vld [vmem:[%s488 + $0x40] sm:$0xff]
        %v498 = vld [vmem:[%s488 + $0x48] sm:$0xff]
        %v499 = vld [vmem:[%s488 + $0x50] sm:$0xff]
        %v500 = vld [vmem:[%s488 + $0x58] sm:$0xff]
        %v501 = vld [vmem:[%s488 + $0x60] sm:$0xff]
        %v502 = vld [vmem:[%s488 + $0x68] sm:$0xff]
        %v503 = vld [vmem:[%s488 + $0x70] sm:$0xff]
        %v504 = vld [vmem:[%s488 + $0x78] sm:$0xff]
        %v505 = vmul.f32 %v438, %v489
        %v506 = vmul.f32 %v441, %v490
        %v507 = vmul.f32 %v444, %v491
        %v508 = vmul.f32 %v447, %v492
        %v509 = vmul.f32 %v450, %v493
        %v510 = vmul.f32 %v453, %v494
        %v511 = vmul.f32 %v456, %v495
        %v512 = vmul.f32 %v459, %v496
        %v513 = vmul.f32 %v462, %v497
        %v514 = vmul.f32 %v465, %v498
        %v515 = vmul.f32 %v468, %v499
        %v516 = vmul.f32 %v471, %v500
        %v517 = vmul.f32 %v474, %v501
        %v518 = vmul.f32 %v477, %v502
        %v519 = vmul.f32 %v480, %v503
        %v520 = vmul.f32 %v483, %v504
        %v521 = vld [vmem:[%s278] sm:$0xff]
        %v522 = vld [vmem:[%s278 + $0x8] sm:$0xff]
        %v523 = vld [vmem:[%s278 + $0x10] sm:$0xff]
        %v524 = vld [vmem:[%s278 + $0x18] sm:$0xff]
        %v525 = vld [vmem:[%s278 + $0x20] sm:$0xff]
        %v526 = vld [vmem:[%s278 + $0x28] sm:$0xff]
        %v527 = vld [vmem:[%s278 + $0x30] sm:$0xff]
        %v528 = vld [vmem:[%s278 + $0x38] sm:$0xff]
        %v529 = vld [vmem:[%s278 + $0x40] sm:$0xff]
        %v530 = vld [vmem:[%s278 + $0x48] sm:$0xff]
        %v531 = vld [vmem:[%s278 + $0x50] sm:$0xff]
        %v532 = vld [vmem:[%s278 + $0x58] sm:$0xff]
        %v533 = vld [vmem:[%s278 + $0x60] sm:$0xff]
        %v534 = vld [vmem:[%s278 + $0x68] sm:$0xff]
        %v535 = vld [vmem:[%s278 + $0x70] sm:$0xff]
        %v536 = vld [vmem:[%s278 + $0x78] sm:$0xff]
        %538 = vset.pattern.permute.xlu0 0
        %539 = vperm.xlu0 %538, %v521
        %v540 = vpop.permute.xlu0 %539
        %543 = vset.pattern.permute.xlu0 0
        %544 = vperm.xlu0 %543, %v522
        %v545 = vpop.permute.xlu0 %544
        %548 = vset.pattern.permute.xlu0 0
        %549 = vperm.xlu0 %548, %v523
        %v550 = vpop.permute.xlu0 %549
        %553 = vset.pattern.permute.xlu0 0
        %554 = vperm.xlu0 %553, %v524
        %v555 = vpop.permute.xlu0 %554
        %558 = vset.pattern.permute.xlu0 0
        %559 = vperm.xlu0 %558, %v525
        %v560 = vpop.permute.xlu0 %559
        %563 = vset.pattern.permute.xlu0 0
        %564 = vperm.xlu0 %563, %v526
        %v565 = vpop.permute.xlu0 %564
        %568 = vset.pattern.permute.xlu0 0
        %569 = vperm.xlu0 %568, %v527
        %v570 = vpop.permute.xlu0 %569
        %573 = vset.pattern.permute.xlu0 0
        %574 = vperm.xlu0 %573, %v528
        %v575 = vpop.permute.xlu0 %574
        %578 = vset.pattern.permute.xlu0 0
        %579 = vperm.xlu0 %578, %v529
        %v580 = vpop.permute.xlu0 %579
        %583 = vset.pattern.permute.xlu0 0
        %584 = vperm.xlu0 %583, %v530
        %v585 = vpop.permute.xlu0 %584
        %588 = vset.pattern.permute.xlu0 0
        %589 = vperm.xlu0 %588, %v531
        %v590 = vpop.permute.xlu0 %589
        %593 = vset.pattern.permute.xlu0 0
        %594 = vperm.xlu0 %593, %v532
        %v595 = vpop.permute.xlu0 %594
        %598 = vset.pattern.permute.xlu0 0
        %599 = vperm.xlu0 %598, %v533
        %v600 = vpop.permute.xlu0 %599
        %603 = vset.pattern.permute.xlu0 0
        %604 = vperm.xlu0 %603, %v534
        %v605 = vpop.permute.xlu0 %604
        %608 = vset.pattern.permute.xlu0 0
        %609 = vperm.xlu0 %608, %v535
        %v610 = vpop.permute.xlu0 %609
        %613 = vset.pattern.permute.xlu0 0
        %614 = vperm.xlu0 %613, %v536
        %v615 = vpop.permute.xlu0 %614
        %v617 = vadd.f32 %v505, %v540
        %v618 = vadd.f32 %v506, %v545
        %v619 = vadd.f32 %v507, %v550
        %v620 = vadd.f32 %v508, %v555
        %v621 = vadd.f32 %v509, %v560
        %v622 = vadd.f32 %v510, %v565
        %v623 = vadd.f32 %v511, %v570
        %v624 = vadd.f32 %v512, %v575
        %v625 = vadd.f32 %v513, %v580
        %v626 = vadd.f32 %v514, %v585
        %v627 = vadd.f32 %v515, %v590
        %v628 = vadd.f32 %v516, %v595
        %v629 = vadd.f32 %v517, %v600
        %v630 = vadd.f32 %v518, %v605
        %v631 = vadd.f32 %v519, %v610
        %v632 = vadd.f32 %v520, %v615
        %v633 = vld [vmem:[%s282] sm:$0x1]
        %v635 = vperm.slane %v633, 0
        %v637 = vadd.f32 %v617, %v635
        %v638 = vadd.f32 %v618, %v635
        %v639 = vadd.f32 %v619, %v635
        %v640 = vadd.f32 %v620, %v635
        %v641 = vadd.f32 %v621, %v635
        %v642 = vadd.f32 %v622, %v635
        %v643 = vadd.f32 %v623, %v635
        %v644 = vadd.f32 %v624, %v635
        %v645 = vadd.f32 %v625, %v635
        %v646 = vadd.f32 %v626, %v635
        %v647 = vadd.f32 %v627, %v635
        %v648 = vadd.f32 %v628, %v635
        %v649 = vadd.f32 %v629, %v635
        %v650 = vadd.f32 %v630, %v635
        %v651 = vadd.f32 %v631, %v635
        %v652 = vadd.f32 %v632, %v635
        %p653 = scmp.eq.s32.totalorder %s21, %s22
        // Predicated region
        $region45: #{tpu_custom_call.1} parent=39 // pred_check
          %p654 = pneg %p653
        $region46: #{tpu_custom_call.1} parent=39 // pred_check_branch
          %656 = sbr.rel (%p654) target = $region48
        $region47: #{tpu_custom_call.1} parent=39 // pred_region
          %v657 = vsub.f32 %v438, %v505
          %v658 = vsub.f32 %v441, %v506
          %v659 = vsub.f32 %v444, %v507
          %v660 = vsub.f32 %v447, %v508
          %v661 = vsub.f32 %v450, %v509
          %v662 = vsub.f32 %v453, %v510
          %v663 = vsub.f32 %v456, %v511
          %v664 = vsub.f32 %v459, %v512
          %v665 = vsub.f32 %v462, %v513
          %v666 = vsub.f32 %v465, %v514
          %v667 = vsub.f32 %v468, %v515
          %v668 = vsub.f32 %v471, %v516
          %v669 = vsub.f32 %v474, %v517
          %v670 = vsub.f32 %v477, %v518
          %v671 = vsub.f32 %v480, %v519
          %v672 = vsub.f32 %v483, %v520
          %v673 = vmul.f32 %v657, 0.5
          %v674 = vmul.f32 %v658, 0.5
          %v675 = vmul.f32 %v659, 0.5
          %v676 = vmul.f32 %v660, 0.5
          %v677 = vmul.f32 %v661, 0.5
          %v678 = vmul.f32 %v662, 0.5
          %v679 = vmul.f32 %v663, 0.5
          %v680 = vmul.f32 %v664, 0.5
          %v681 = vmul.f32 %v665, 0.5
          %v682 = vmul.f32 %v666, 0.5
          %v683 = vmul.f32 %v667, 0.5
          %v684 = vmul.f32 %v668, 0.5
          %v685 = vmul.f32 %v669, 0.5
          %v686 = vmul.f32 %v670, 0.5
          %v687 = vmul.f32 %v671, 0.5
          %v688 = vmul.f32 %v672, 0.5
          %689 = vadd.xlane.f32.xlu0 %v673
          %v690 = vpop.xlane.xlu0 %689
          %691 = vadd.xlane.f32.xlu0 %v674
          %v692 = vpop.xlane.xlu0 %691
          %693 = vadd.xlane.f32.xlu0 %v675
          %v694 = vpop.xlane.xlu0 %693
          %695 = vadd.xlane.f32.xlu0 %v676
          %v696 = vpop.xlane.xlu0 %695
          %697 = vadd.xlane.f32.xlu0 %v677
          %v698 = vpop.xlane.xlu0 %697
          %699 = vadd.xlane.f32.xlu0 %v678
          %v700 = vpop.xlane.xlu0 %699
          %701 = vadd.xlane.f32.xlu0 %v679
          %v702 = vpop.xlane.xlu0 %701
          %703 = vadd.xlane.f32.xlu0 %v680
          %v704 = vpop.xlane.xlu0 %703
          %705 = vadd.xlane.f32.xlu0 %v681
          %v706 = vpop.xlane.xlu0 %705
          %707 = vadd.xlane.f32.xlu0 %v682
          %v708 = vpop.xlane.xlu0 %707
          %709 = vadd.xlane.f32.xlu0 %v683
          %v710 = vpop.xlane.xlu0 %709
          %711 = vadd.xlane.f32.xlu0 %v684
          %v712 = vpop.xlane.xlu0 %711
          %713 = vadd.xlane.f32.xlu0 %v685
          %v714 = vpop.xlane.xlu0 %713
          %715 = vadd.xlane.f32.xlu0 %v686
          %v716 = vpop.xlane.xlu0 %715
          %717 = vadd.xlane.f32.xlu0 %v687
          %v718 = vpop.xlane.xlu0 %717
          %719 = vadd.xlane.f32.xlu0 %v688
          %v720 = vpop.xlane.xlu0 %719
          %vm721 = vcmask 7168
          %722 = vst.msk [vmem:[#allocation4] sm:$0xff] %vm721, %v690
          %723 = vst.msk [vmem:[#allocation4 + $0x8] sm:$0xff] %vm721, %v692
          %724 = vst.msk [vmem:[#allocation4 + $0x10] sm:$0xff] %vm721, %v694
          %725 = vst.msk [vmem:[#allocation4 + $0x18] sm:$0xff] %vm721, %v696
          %726 = vst.msk [vmem:[#allocation4 + $0x20] sm:$0xff] %vm721, %v698
          %727 = vst.msk [vmem:[#allocation4 + $0x28] sm:$0xff] %vm721, %v700
          %728 = vst.msk [vmem:[#allocation4 + $0x30] sm:$0xff] %vm721, %v702
          %729 = vst.msk [vmem:[#allocation4 + $0x38] sm:$0xff] %vm721, %v704
          %730 = vst.msk [vmem:[#allocation4 + $0x40] sm:$0xff] %vm721, %v706
          %731 = vst.msk [vmem:[#allocation4 + $0x48] sm:$0xff] %vm721, %v708
          %732 = vst.msk [vmem:[#allocation4 + $0x50] sm:$0xff] %vm721, %v710
          %733 = vst.msk [vmem:[#allocation4 + $0x58] sm:$0xff] %vm721, %v712
          %734 = vst.msk [vmem:[#allocation4 + $0x60] sm:$0xff] %vm721, %v714
          %735 = vst.msk [vmem:[#allocation4 + $0x68] sm:$0xff] %vm721, %v716
          %736 = vst.msk [vmem:[#allocation4 + $0x70] sm:$0xff] %vm721, %v718
          %737 = vst.msk [vmem:[#allocation4 + $0x78] sm:$0xff] %vm721, %v720
          %v738 = vadd.f32 %v673, %v674
          %v739 = vadd.f32 %v738, %v675
          %v740 = vadd.f32 %v739, %v676
          %v741 = vadd.f32 %v740, %v677
          %v742 = vadd.f32 %v741, %v678
          %v743 = vadd.f32 %v742, %v679
          %v744 = vadd.f32 %v743, %v680
          %v745 = vadd.f32 %v744, %v681
          %v746 = vadd.f32 %v745, %v682
          %v747 = vadd.f32 %v746, %v683
          %v748 = vadd.f32 %v747, %v684
          %v749 = vadd.f32 %v748, %v685
          %v750 = vadd.f32 %v749, %v686
          %v751 = vadd.f32 %v750, %v687
          %v752 = vadd.f32 %v751, %v688
          %v753 = vrot.slane %v752, 4
          %v754 = vadd.f32 %v752, %v753
          %v755 = vrot.slane %v754, 2
          %v756 = vadd.f32 %v754, %v755
          %v757 = vrot.slane %v756, 1
          %v758 = vadd.f32 %v756, %v757
          %s759 = scalar_lea.vmem [#allocation5], %s22
          %760 = vst [vmem:[%s759] sm:$0x1] %v758
        $region48: #{tpu_custom_call.1} parent=39 // pred_fallthru
          _
        // Predicated region
        $region49: #{tpu_custom_call.1} parent=39 // pred_check
          %p761 = pneg %p284
        $region50: #{tpu_custom_call.1} parent=39 // pred_check_branch
          %763 = sbr.rel (%p761) target = $region52
        $region51: #{tpu_custom_call.1} parent=39 // pred_region
          %vm764 = vcmask 7168
          %765 = vst.msk [vmem:[#allocation2] sm:$0xff] %vm764, -1e+30
          %766 = vst.msk [vmem:[#allocation2 + $0x8] sm:$0xff] %vm764, -1e+30
          %767 = vst.msk [vmem:[#allocation2 + $0x10] sm:$0xff] %vm764, -1e+30
          %768 = vst.msk [vmem:[#allocation2 + $0x18] sm:$0xff] %vm764, -1e+30
          %769 = vst.msk [vmem:[#allocation2 + $0x20] sm:$0xff] %vm764, -1e+30
          %770 = vst.msk [vmem:[#allocation2 + $0x28] sm:$0xff] %vm764, -1e+30
          %771 = vst.msk [vmem:[#allocation2 + $0x30] sm:$0xff] %vm764, -1e+30
          %772 = vst.msk [vmem:[#allocation2 + $0x38] sm:$0xff] %vm764, -1e+30
          %773 = vst.msk [vmem:[#allocation2 + $0x40] sm:$0xff] %vm764, -1e+30
          %774 = vst.msk [vmem:[#allocation2 + $0x48] sm:$0xff] %vm764, -1e+30
          %775 = vst.msk [vmem:[#allocation2 + $0x50] sm:$0xff] %vm764, -1e+30
          %776 = vst.msk [vmem:[#allocation2 + $0x58] sm:$0xff] %vm764, -1e+30
          %777 = vst.msk [vmem:[#allocation2 + $0x60] sm:$0xff] %vm764, -1e+30
          %778 = vst.msk [vmem:[#allocation2 + $0x68] sm:$0xff] %vm764, -1e+30
          %779 = vst.msk [vmem:[#allocation2 + $0x70] sm:$0xff] %vm764, -1e+30
          %780 = vst.msk [vmem:[#allocation2 + $0x78] sm:$0xff] %vm764, -1e+30
        $region52: #{tpu_custom_call.1} parent=39 // pred_fallthru
          _
        %781 = vmax.xlane.f32.xlu0 %v637
        %v782 = vpop.xlane.xlu0 %781
        %783 = vmax.xlane.f32.xlu0 %v638
        %v784 = vpop.xlane.xlu0 %783
        %785 = vmax.xlane.f32.xlu0 %v639
        %v786 = vpop.xlane.xlu0 %785
        %787 = vmax.xlane.f32.xlu0 %v640
        %v788 = vpop.xlane.xlu0 %787
        %789 = vmax.xlane.f32.xlu0 %v641
        %v790 = vpop.xlane.xlu0 %789
        %791 = vmax.xlane.f32.xlu0 %v642
        %v792 = vpop.xlane.xlu0 %791
        %793 = vmax.xlane.f32.xlu0 %v643
        %v794 = vpop.xlane.xlu0 %793
        %795 = vmax.xlane.f32.xlu0 %v644
        %v796 = vpop.xlane.xlu0 %795
        %797 = vmax.xlane.f32.xlu0 %v645
        %v798 = vpop.xlane.xlu0 %797
        %799 = vmax.xlane.f32.xlu0 %v646
        %v800 = vpop.xlane.xlu0 %799
        %801 = vmax.xlane.f32.xlu0 %v647
        %v802 = vpop.xlane.xlu0 %801
        %803 = vmax.xlane.f32.xlu0 %v648
        %v804 = vpop.xlane.xlu0 %803
        %805 = vmax.xlane.f32.xlu0 %v649
        %v806 = vpop.xlane.xlu0 %805
        %807 = vmax.xlane.f32.xlu0 %v650
        %v808 = vpop.xlane.xlu0 %807
        %809 = vmax.xlane.f32.xlu0 %v651
        %v810 = vpop.xlane.xlu0 %809
        %811 = vmax.xlane.f32.xlu0 %v652
        %v812 = vpop.xlane.xlu0 %811
        %v813 = vld [vmem:[#allocation2] sm:$0xff]
        %v814 = vld [vmem:[#allocation2 + $0x8] sm:$0xff]
        %v815 = vld [vmem:[#allocation2 + $0x10] sm:$0xff]
        %v816 = vld [vmem:[#allocation2 + $0x18] sm:$0xff]
        %v817 = vld [vmem:[#allocation2 + $0x20] sm:$0xff]
        %v818 = vld [vmem:[#allocation2 + $0x28] sm:$0xff]
        %v819 = vld [vmem:[#allocation2 + $0x30] sm:$0xff]
        %v820 = vld [vmem:[#allocation2 + $0x38] sm:$0xff]
        %v821 = vld [vmem:[#allocation2 + $0x40] sm:$0xff]
        %v822 = vld [vmem:[#allocation2 + $0x48] sm:$0xff]
        %v823 = vld [vmem:[#allocation2 + $0x50] sm:$0xff]
        %v824 = vld [vmem:[#allocation2 + $0x58] sm:$0xff]
        %v825 = vld [vmem:[#allocation2 + $0x60] sm:$0xff]
        %v826 = vld [vmem:[#allocation2 + $0x68] sm:$0xff]
        %v827 = vld [vmem:[#allocation2 + $0x70] sm:$0xff]
        %v828 = vld [vmem:[#allocation2 + $0x78] sm:$0xff]
        %vm829 = vcmask 7168
        %v830 = vsel %vm829, %v813, %v782
        %v831 = vsel %vm829, %v814, %v784
        %v832 = vsel %vm829, %v815, %v786
        %v833 = vsel %vm829, %v816, %v788
        %v834 = vsel %vm829, %v817, %v790
        %v835 = vsel %vm829, %v818, %v792
        %v836 = vsel %vm829, %v819, %v794
        %v837 = vsel %vm829, %v820, %v796
        %v838 = vsel %vm829, %v821, %v798
        %v839 = vsel %vm829, %v822, %v800
        %v840 = vsel %vm829, %v823, %v802
        %v841 = vsel %vm829, %v824, %v804
        %v842 = vsel %vm829, %v825, %v806
        %v843 = vsel %vm829, %v826, %v808
        %v844 = vsel %vm829, %v827, %v810
        %v845 = vsel %vm829, %v828, %v812
        %vm846 = vcmask 15360
        %v847 = vsel %vm846, %v830, -inf
        %848 = vmax.xlane.f32.xlu0 %v847
        %v849 = vpop.xlane.xlu0 %848
        %v850 = vsel %vm846, %v831, -inf
        %851 = vmax.xlane.f32.xlu0 %v850
        %v852 = vpop.xlane.xlu0 %851
        %v853 = vsel %vm846, %v832, -inf
        %854 = vmax.xlane.f32.xlu0 %v853
        %v855 = vpop.xlane.xlu0 %854
        %v856 = vsel %vm846, %v833, -inf
        %857 = vmax.xlane.f32.xlu0 %v856
        %v858 = vpop.xlane.xlu0 %857
        %v859 = vsel %vm846, %v834, -inf
        %860 = vmax.xlane.f32.xlu0 %v859
        %v861 = vpop.xlane.xlu0 %860
        %v862 = vsel %vm846, %v835, -inf
        %863 = vmax.xlane.f32.xlu0 %v862
        %v864 = vpop.xlane.xlu0 %863
        %v865 = vsel %vm846, %v836, -inf
        %866 = vmax.xlane.f32.xlu0 %v865
        %v867 = vpop.xlane.xlu0 %866
        %v868 = vsel %vm846, %v837, -inf
        %869 = vmax.xlane.f32.xlu0 %v868
        %v870 = vpop.xlane.xlu0 %869
        %v871 = vsel %vm846, %v838, -inf
        %872 = vmax.xlane.f32.xlu0 %v871
        %v873 = vpop.xlane.xlu0 %872
        %v874 = vsel %vm846, %v839, -inf
        %875 = vmax.xlane.f32.xlu0 %v874
        %v876 = vpop.xlane.xlu0 %875
        %v877 = vsel %vm846, %v840, -inf
        %878 = vmax.xlane.f32.xlu0 %v877
        %v879 = vpop.xlane.xlu0 %878
        %v880 = vsel %vm846, %v841, -inf
        %881 = vmax.xlane.f32.xlu0 %v880
        %v882 = vpop.xlane.xlu0 %881
        %v883 = vsel %vm846, %v842, -inf
        %884 = vmax.xlane.f32.xlu0 %v883
        %v885 = vpop.xlane.xlu0 %884
        %v886 = vsel %vm846, %v843, -inf
        %887 = vmax.xlane.f32.xlu0 %v886
        %v888 = vpop.xlane.xlu0 %887
        %v889 = vsel %vm846, %v844, -inf
        %890 = vmax.xlane.f32.xlu0 %v889
        %v891 = vpop.xlane.xlu0 %890
        %v892 = vsel %vm846, %v845, -inf
        %893 = vmax.xlane.f32.xlu0 %v892
        %v894 = vpop.xlane.xlu0 %893
        %895 = vst.msk [vmem:[#allocation2] sm:$0xff] %vm829, %v849
        %896 = vst.msk [vmem:[#allocation2 + $0x8] sm:$0xff] %vm829, %v852
        %897 = vst.msk [vmem:[#allocation2 + $0x10] sm:$0xff] %vm829, %v855
        %898 = vst.msk [vmem:[#allocation2 + $0x18] sm:$0xff] %vm829, %v858
        %899 = vst.msk [vmem:[#allocation2 + $0x20] sm:$0xff] %vm829, %v861
        %900 = vst.msk [vmem:[#allocation2 + $0x28] sm:$0xff] %vm829, %v864
        %901 = vst.msk [vmem:[#allocation2 + $0x30] sm:$0xff] %vm829, %v867
        %902 = vst.msk [vmem:[#allocation2 + $0x38] sm:$0xff] %vm829, %v870
        %903 = vst.msk [vmem:[#allocation2 + $0x40] sm:$0xff] %vm829, %v873
        %904 = vst.msk [vmem:[#allocation2 + $0x48] sm:$0xff] %vm829, %v876
        %905 = vst.msk [vmem:[#allocation2 + $0x50] sm:$0xff] %vm829, %v879
        %906 = vst.msk [vmem:[#allocation2 + $0x58] sm:$0xff] %vm829, %v882
        %907 = vst.msk [vmem:[#allocation2 + $0x60] sm:$0xff] %vm829, %v885
        %908 = vst.msk [vmem:[#allocation2 + $0x68] sm:$0xff] %vm829, %v888
        %909 = vst.msk [vmem:[#allocation2 + $0x70] sm:$0xff] %vm829, %v891
        %910 = vst.msk [vmem:[#allocation2 + $0x78] sm:$0xff] %vm829, %v894
        %p911 = scmp.eq.s32.totalorder %s22, 1
        // Predicated region
        $region53: #{tpu_custom_call.1} parent=39 // pred_check
          %p912 = pneg %p911
        $region54: #{tpu_custom_call.1} parent=39 // pred_check_branch
          %914 = sbr.rel (%p912) target = $region56
        $region55: #{tpu_custom_call.1} parent=39 // pred_region
          %v915 = vld [vmem:[#allocation4] sm:$0xff]
          %v916 = vld [vmem:[#allocation4 + $0x8] sm:$0xff]
          %v917 = vld [vmem:[#allocation4 + $0x10] sm:$0xff]
          %v918 = vld [vmem:[#allocation4 + $0x18] sm:$0xff]
          %v919 = vld [vmem:[#allocation4 + $0x20] sm:$0xff]
          %v920 = vld [vmem:[#allocation4 + $0x28] sm:$0xff]
          %v921 = vld [vmem:[#allocation4 + $0x30] sm:$0xff]
          %v922 = vld [vmem:[#allocation4 + $0x38] sm:$0xff]
          %v923 = vld [vmem:[#allocation4 + $0x40] sm:$0xff]
          %v924 = vld [vmem:[#allocation4 + $0x48] sm:$0xff]
          %v925 = vld [vmem:[#allocation4 + $0x50] sm:$0xff]
          %v926 = vld [vmem:[#allocation4 + $0x58] sm:$0xff]
          %v927 = vld [vmem:[#allocation4 + $0x60] sm:$0xff]
          %v928 = vld [vmem:[#allocation4 + $0x68] sm:$0xff]
          %v929 = vld [vmem:[#allocation4 + $0x70] sm:$0xff]
          %v930 = vld [vmem:[#allocation4 + $0x78] sm:$0xff]
          %v931 = vsub.f32 0.2, %v915
          %v932 = vsub.f32 0.2, %v916
          %v933 = vsub.f32 0.2, %v917
          %v934 = vsub.f32 0.2, %v918
          %v935 = vsub.f32 0.2, %v919
          %v936 = vsub.f32 0.2, %v920
          %v937 = vsub.f32 0.2, %v921
          %v938 = vsub.f32 0.2, %v922
          %v939 = vsub.f32 0.2, %v923
          %v940 = vsub.f32 0.2, %v924
          %v941 = vsub.f32 0.2, %v925
          %v942 = vsub.f32 0.2, %v926
          %v943 = vsub.f32 0.2, %v927
          %v944 = vsub.f32 0.2, %v928
          %v945 = vsub.f32 0.2, %v929
          %v946 = vsub.f32 0.2, %v930
          %v947 = vadd.f32 %v849, %v931
          %v948 = vadd.f32 %v852, %v932
          %v949 = vadd.f32 %v855, %v933
          %v950 = vadd.f32 %v858, %v934
          %v951 = vadd.f32 %v861, %v935
          %v952 = vadd.f32 %v864, %v936
          %v953 = vadd.f32 %v867, %v937
          %v954 = vadd.f32 %v870, %v938
          %v955 = vadd.f32 %v873, %v939
          %v956 = vadd.f32 %v876, %v940
          %v957 = vadd.f32 %v879, %v941
          %v958 = vadd.f32 %v882, %v942
          %v959 = vadd.f32 %v885, %v943
          %v960 = vadd.f32 %v888, %v944
          %v961 = vadd.f32 %v891, %v945
          %v962 = vadd.f32 %v894, %v946
          %v963 = vmax.f32 %v947, 0.0
          %v964 = vmax.f32 %v948, 0.0
          %v965 = vmax.f32 %v949, 0.0
          %v966 = vmax.f32 %v950, 0.0
          %v967 = vmax.f32 %v951, 0.0
          %v968 = vmax.f32 %v952, 0.0
          %v969 = vmax.f32 %v953, 0.0
          %v970 = vmax.f32 %v954, 0.0
          %v971 = vmax.f32 %v955, 0.0
          %v972 = vmax.f32 %v956, 0.0
          %v973 = vmax.f32 %v957, 0.0
          %v974 = vmax.f32 %v958, 0.0
          %v975 = vmax.f32 %v959, 0.0
          %v976 = vmax.f32 %v960, 0.0
          %v977 = vmax.f32 %v961, 0.0
          %v978 = vmax.f32 %v962, 0.0
          %v979 = vadd.f32 %v963, 0.0
          %v980 = vadd.f32 %v964, 0.0
          %v981 = vadd.f32 %v965, 0.0
          %v982 = vadd.f32 %v966, 0.0
          %v983 = vadd.f32 %v967, 0.0
          %v984 = vadd.f32 %v968, 0.0
          %v985 = vadd.f32 %v969, 0.0
          %v986 = vadd.f32 %v970, 0.0
          %v987 = vadd.f32 %v971, 0.0
          %v988 = vadd.f32 %v972, 0.0
          %v989 = vadd.f32 %v973, 0.0
          %v990 = vadd.f32 %v974, 0.0
          %v991 = vadd.f32 %v975, 0.0
          %v992 = vadd.f32 %v976, 0.0
          %v993 = vadd.f32 %v977, 0.0
          %v994 = vadd.f32 %v978, 0.0
          %v995 = vsel %vm829, %v979, 0.0
          %v996 = vsel %vm829, %v980, 0.0
          %v997 = vadd.f32 %v995, %v996
          %v998 = vsel %vm829, %v981, 0.0
          %v999 = vadd.f32 %v997, %v998
          %v1000 = vsel %vm829, %v982, 0.0
          %v1001 = vadd.f32 %v999, %v1000
          %v1002 = vsel %vm829, %v983, 0.0
          %v1003 = vadd.f32 %v1001, %v1002
          %v1004 = vsel %vm829, %v984, 0.0
          %v1005 = vadd.f32 %v1003, %v1004
          %v1006 = vsel %vm829, %v985, 0.0
          %v1007 = vadd.f32 %v1005, %v1006
          %v1008 = vsel %vm829, %v986, 0.0
          %v1009 = vadd.f32 %v1007, %v1008
          %v1010 = vsel %vm829, %v987, 0.0
          %v1011 = vadd.f32 %v1009, %v1010
          %v1012 = vsel %vm829, %v988, 0.0
          %v1013 = vadd.f32 %v1011, %v1012
          %v1014 = vsel %vm829, %v989, 0.0
          %v1015 = vadd.f32 %v1013, %v1014
          %v1016 = vsel %vm829, %v990, 0.0
          %v1017 = vadd.f32 %v1015, %v1016
          %v1018 = vsel %vm829, %v991, 0.0
          %v1019 = vadd.f32 %v1017, %v1018
          %v1020 = vsel %vm829, %v992, 0.0
          %v1021 = vadd.f32 %v1019, %v1020
          %v1022 = vsel %vm829, %v993, 0.0
          %v1023 = vadd.f32 %v1021, %v1022
          %v1024 = vsel %vm829, %v994, 0.0
          %v1025 = vadd.f32 %v1023, %v1024
          %v1026 = vrot.slane %v1025, 4
          %v1027 = vadd.f32 %v1025, %v1026
          %v1028 = vrot.slane %v1027, 2
          %v1029 = vadd.f32 %v1027, %v1028
          %v1030 = vrot.slane %v1029, 1
          %v1031 = vadd.f32 %v1029, %v1030
          %v1032 = vld [vmem:[#allocation6] sm:$0x1]
          %v1033 = vadd.f32 %v1032, %v1031
          %vm1034 = vcmask 0
          %1035 = vst.msk [vmem:[#allocation6] sm:$0x1] %vm1034, %v1033
        $region56: #{tpu_custom_call.1} parent=39 // pred_fallthru
          _
        // Predicated region
        $region57: #{tpu_custom_call.1} parent=39 // pred_check
          %p1036 = pneg %p283
        $region58: #{tpu_custom_call.1} parent=39 // pred_check_branch
          %1038 = sbr.rel (%p1036) target = $region60
        $region59: #{tpu_custom_call.1} parent=39 // pred_region
          %s1039 = scalar_lea.vmem [#allocation3], %s22
          %1040 = vst [vmem:[%s1039] sm:$0x1] -1e+30
        $region60: #{tpu_custom_call.1} parent=39 // pred_fallthru
          _
        %v1041 = vmax.f32 %v637, %v641
        %v1042 = vmax.f32 %v638, %v642
        %v1043 = vmax.f32 %v639, %v643
        %v1044 = vmax.f32 %v640, %v644
        %v1045 = vmax.f32 %v1041, %v645
        %v1046 = vmax.f32 %v1042, %v646
        %v1047 = vmax.f32 %v1043, %v647
        %v1048 = vmax.f32 %v1044, %v648
        %v1049 = vmax.f32 %v1045, %v649
        %v1050 = vmax.f32 %v1046, %v650
        %v1051 = vmax.f32 %v1047, %v651
        %v1052 = vmax.f32 %v1048, %v652
        %v1053 = vmax.f32 %v1049, %v1050
        %v1054 = vmax.f32 %v1051, %v1052
        %v1055 = vmax.f32 %v1053, %v1054
        %v1056 = vrot.slane %v1055, 4
        %v1057 = vmax.f32 %v1055, %v1056
        %v1058 = vrot.slane %v1057, 2
        %v1059 = vmax.f32 %v1057, %v1058
        %v1060 = vrot.slane %v1059, 1
        %v1061 = vmax.f32 %v1059, %v1060
        %s1062 = scalar_lea.vmem [#allocation3], %s22
        %v1063 = vld [vmem:[%s1062] sm:$0x1]
        %vm1064 = vcmask 1040384
        %v1065 = vsel %vm1064, %v1063, %v1061
        %vm1066 = vcmask 1041408
        %v1067 = vsel %vm1066, %v1065, -inf
        %v1068 = vrot.slane %v1067, 4
        %v1069 = vmax.f32 %v1067, %v1068
        %v1070 = vrot.slane %v1069, 2
        %v1071 = vmax.f32 %v1069, %v1070
        %v1072 = vrot.slane %v1071, 1
        %v1073 = vmax.f32 %v1071, %v1072
        %1074 = vst [vmem:[%s1062] sm:$0x1] %v1073
        %p1075 = scmp.eq.s32.totalorder %s21, 1
        // Predicated region
        $region61: #{tpu_custom_call.1} parent=39 // pred_check
          %p1076 = pneg %p1075
        $region62: #{tpu_custom_call.1} parent=39 // pred_check_branch
          %1078 = sbr.rel (%p1076) target = $region64
        $region63: #{tpu_custom_call.1} parent=39 // pred_region
          %s1079 = scalar_lea.vmem [#allocation5], %s22
          %v1080 = vld [vmem:[%s1079] sm:$0x1]
          %v1081 = vsub.f32 0.2, %v1080
          %v1082 = vadd.f32 %v1073, %v1081
          %v1083 = vmax.f32 %v1082, 0.0
          %v1084 = vsel %vm1064, %v1083, 0.0
          %1085 = vadd.xlane.f32.xlu0 %v1084
          %v1086 = vpop.xlane.xlu0 %1085
          %v1087 = vadd.f32 %v1086, 0.0
          %v1088 = vld [vmem:[#allocation6] sm:$0x1]
          %v1089 = vadd.f32 %v1088, %v1087
          %vm1090 = vcmask 0
          %1091 = vst.msk [vmem:[#allocation6] sm:$0x1] %vm1090, %v1089
        $region64: #{tpu_custom_call.1} parent=39 // pred_fallthru
          _
        // Predicated region
        $region65: #{tpu_custom_call.1} parent=39 // pred_check
          %p1092 = pneg %p167
        $region66: #{tpu_custom_call.1} parent=39 // pred_check_branch
          %1094 = sbr.rel (%p1092) target = $region68
        $region67: #{tpu_custom_call.1} parent=39 // pred_region
          %1096 = vsyncadd [#allocation7], 0
          %s1098 = sshll.u32 [#allocation6], 4
          %s1099 = int_to_ptr.vmem [resolvable:$true] %s1098
          %s1100 = sshll.u32 %s5, 4
          %s1101 = int_to_ptr.hbm [resolvable:$true] %s1100
          %1103 = dma.vmem_to_hbm [thread:$0]  %s1099, 16, %s1101, [#allocation7]
        $region68: #{tpu_custom_call.1} parent=39 // pred_fallthru
          _
        // Predicated region
        $region69: #{tpu_custom_call.1} parent=39 // pred_check
          %p1104 = pneg %p167
        $region70: #{tpu_custom_call.1} parent=39 // pred_check_branch
          %1106 = sbr.rel (%p1104) target = $region72
        $region71: #{tpu_custom_call.1} parent=39 // pred_region
          %1108 = dma.done [#allocation7], 16
        $region72: #{tpu_custom_call.1} parent=39 // pred_fallthru
          _
      $region40: #{tpu_custom_call.1} parent=5 // pred_fallthru
        _
      %p1109 = scmp.le.s32.totalorder 2, %s12
      // Predicated region
      $region73: #{tpu_custom_call.1} parent=5 // pred_check
        %p1110 = pneg %p1109
      $region74: #{tpu_custom_call.1} parent=5 // pred_check_branch
        %1112 = sbr.rel (%p1110) target = $region76
      $region75: #{tpu_custom_call.1} parent=5 // pred_region
        %s1113 = ssub.s32 %s12, 2
      $region76: #{tpu_custom_call.1} parent=5 // pred_fallthru
        _
    $region6: #{tpu_custom_call.1} parent=1 // loop_footer
      %s16 = sadd.s32 1, %s12
    $region7: #{tpu_custom_call.1} parent=1 // loop_footer_branch
      %11 = sbr.rel target = $region3
    $region8: #{tpu_custom_call.1} parent=1 // loop_exit
      _
    %1114 = vsyncpa [#allocation7], 1
    %s1115 = scalar_lea.sflag [#allocation7], 1
    %1116 = vsyncpa %s1115, 1

</llo_original>
